<compile_context>
chip_gen: v6e
topology: v6e:2x2x1
jax: 0.10.0
libtpu: 0.0.40
codegen_flags: <defaults>
</compile_context>

<pallas_src>
import functools

import jax
import jax.numpy as jnp
from jax.experimental import pallas as pl
from jax.experimental.pallas import tpu as pltpu


def _round_up(x, m):
    return ((x + m - 1) // m) * m


# ---------------------------------------------------------------------------
# Pass 1 (BN path): im2col GEMM + per-channel sum / sum-of-squares.
# grid = (cout_tiles [parallel], pixel_tiles [arbitrary]).
# ---------------------------------------------------------------------------
def _gemm_stats_kernel(p_ref, w_ref, conv_ref, sum_ref, sq_ref):
    """
    p_ref    : (k_pad, tile_pix)      bf16 im2col patch tile (pixels on lanes)
    w_ref    : (tile_cout, k_pad)     bf16 weight tile
    conv_ref : (tile_cout, tile_pix)  f32 conv tile (tiled, pipelined writeback)
    sum_ref  : (tile_cout, 1)         f32 per-channel sum      (resident over t)
    sq_ref   : (tile_cout, 1)         f32 per-channel sum(x^2) (resident over t)
    """
    t = pl.program_id(1)

    conv = jnp.dot(w_ref[...], p_ref[...],
                   preferred_element_type=jnp.float32)

    @pl.when(t == 0)
    def _init():
        sum_ref[...] = jnp.zeros_like(sum_ref)
        sq_ref[...] = jnp.zeros_like(sq_ref)

    # Padded pixel columns are all-zero patches -> zero conv values, so they
    # contribute nothing to the running sums (divide by n_valid_pix later).
    sum_ref[...] += jnp.sum(conv, axis=-1, keepdims=True)
    sq_ref[...] += jnp.sum(conv * conv, axis=-1, keepdims=True)
    conv_ref[...] = conv


# ---------------------------------------------------------------------------
# Pass 2 (BN path): streamed per-channel scale/shift (+ ReLU).
# ---------------------------------------------------------------------------
def _scale_shift_relu_kernel(x_ref, scale_ref, shift_ref, o_ref, *, use_relu):
    y = x_ref[...] * scale_ref[...] + shift_ref[...]
    if use_relu:
        y = jnp.maximum(y, 0.0)
    o_ref[...] = y.astype(o_ref.dtype)


# ---------------------------------------------------------------------------
# Single pass (no BN): im2col GEMM + bias (+ ReLU), tiled writeback.
# ---------------------------------------------------------------------------
def _gemm_bias_relu_kernel(p_ref, w_ref, b_ref, o_ref, *, use_relu):
    conv = jnp.dot(w_ref[...], p_ref[...],
                   preferred_element_type=jnp.float32)
    y = conv + b_ref[...]
    if use_relu:
        y = jnp.maximum(y, 0.0)
    o_ref[...] = y.astype(o_ref.dtype)


def conv_block_forward(x_nchw, w_oihw, bias, gamma, beta, *,
                       stride=1, padding=0, batchnorm=True, relu=True,
                       eps=1e-5, tile_pix=512, compute_dtype=jnp.bfloat16,
                       out_dtype=jnp.float32):
    """ConvBlock forward: im2col in the XLA wrapper, GEMM(+BN+ReLU) in Pallas."""
    N, Cin, H, W = x_nchw.shape
    Cout, Cin_w, KH, KW = w_oihw.shape
    assert Cin == Cin_w
    assert tile_pix % 128 == 0, "tile_pix must be a multiple of 128 (lane-dense stores)"

    x = x_nchw
    if padding:
        x = jnp.pad(x, ((0, 0), (0, 0),
                        (padding, padding), (padding, padding)))
    Hp, Wp = H + 2 * padding, W + 2 * padding
    OH = (Hp - KH) // stride + 1
    OW = (Wp - KW) // stride + 1

    n_pix = N * OH * OW
    k_dim = KH * KW * Cin

    # Contraction dim padded only to the bf16 sublane multiple (16), not 128:
    # the blocks span the full K axis, so the (8,128) BlockSpec rule holds and
    # the dominant patch HBM stream stays ~2.7x smaller than with k_pad=128.
    k_pad = _round_up(k_dim, 16)
    cout_pad = _round_up(Cout, 16)

    tile_pix = min(tile_pix, _round_up(n_pix, 128))
    n_pix_pad = _round_up(n_pix, tile_pix)
    n_pix_tiles = n_pix_pad // tile_pix

    if cout_pad <= 256:
        tile_cout = cout_pad
    else:
        tile_cout = 256
        cout_pad = _round_up(cout_pad, tile_cout)
    n_cout_tiles = cout_pad // tile_cout

    # ---- im2col: (Kdim, Npix), K ordered (kh, kw, cin), pixels (n, oh, ow) ----
    # TODO(synk): build the patch slab in-kernel for large inputs (see header).
    cols = []
    for kh in range(KH):
        for kw in range(KW):
            cols.append(x[:, :,
                          kh:kh + (OH - 1) * stride + 1:stride,
                          kw:kw + (OW - 1) * stride + 1:stride])  # (N,Cin,OH,OW)
    patches = jnp.stack(cols, axis=0)                 # (KH*KW, N, Cin, OH, OW)
    patches = patches.transpose(0, 2, 1, 3, 4)        # (KH*KW, Cin, N, OH, OW)
    patches = patches.reshape(k_dim, n_pix)
    patches = jnp.pad(patches,
                      ((0, k_pad - k_dim), (0, n_pix_pad - n_pix)))
    patches = patches.astype(compute_dtype)

    # Weights: OIHW -> (Cout, KH, KW, Cin) -> (Cout, Kdim); same K ordering.
    w2 = jnp.transpose(w_oihw, (0, 2, 3, 1)).reshape(Cout, k_dim)
    w2 = jnp.pad(w2, ((0, cout_pad - Cout), (0, k_pad - k_dim)))
    w2 = w2.astype(compute_dtype)

    def _col(v):
        # Zero-pad to (cout_pad, 1).  NOTE: padded gamma rows MUST be zero so
        # scale=0 on padded channels (no rsqrt(eps)-scaled garbage rows).
        v = v.reshape(Cout, 1).astype(jnp.float32)
        return jnp.pad(v, ((0, cout_pad - Cout), (0, 0)))

    b_col, g_col, be_col = _col(bias), _col(gamma), _col(beta)

    # VMEM request: double-buffered footprint + headroom, capped at 48 MiB
    # (well below v7x's 64 MiB physical VMEM).
    out_bytes = jnp.dtype(out_dtype).itemsize
    bytes_pass1 = 2 * (k_pad * tile_pix * 2 + tile_cout * k_pad * 2
                       + tile_cout * tile_pix * 4 + 4 * tile_cout * 4)
    bytes_pass2 = 2 * (tile_cout * tile_pix * (4 + out_bytes)
                       + 3 * tile_cout * 4)
    vmem_limit = int(min(48 << 20,
                         max(16 << 20,
                             2 * max(bytes_pass1, bytes_pass2) + (4 << 20))))

    grid = (n_cout_tiles, n_pix_tiles)
    patch_spec = pl.BlockSpec((k_pad, tile_pix), lambda c, t: (0, t))
    w_spec = pl.BlockSpec((tile_cout, k_pad), lambda c, t: (c, 0))
    col_spec = pl.BlockSpec((tile_cout, 1), lambda c, t: (c, 0))
    tile_out_spec = pl.BlockSpec((tile_cout, tile_pix), lambda c, t: (c, t))

    if batchnorm:
        # ---- Pass 1: GEMM + per-channel sum / sum(x^2).  The conv bias is
        # cancelled exactly by the BN mean subtraction, so it is never added.
        conv2d, ch_sum, ch_sq = pl.pallas_call(
            _gemm_stats_kernel,
            out_shape=(
                jax.ShapeDtypeStruct((cout_pad, n_pix_pad), jnp.float32),
                jax.ShapeDtypeStruct((cout_pad, 1), jnp.float32),
                jax.ShapeDtypeStruct((cout_pad, 1), jnp.float32)),
            grid_spec=pltpu.PrefetchScalarGridSpec(
                num_scalar_prefetch=0,
                grid=grid,
                in_specs=[patch_spec, w_spec],
                out_specs=[tile_out_spec, col_spec, col_spec]),
            compiler_params=pltpu.CompilerParams(
                dimension_semantics=("parallel", "arbitrary"),
                vmem_limit_bytes=vmem_limit),
        )(patches, w2)

        # Tiny per-channel epilogue math (cout_pad values) stays in XLA.
        # NOTE: single-pass E[x^2]-E[x]^2 variance in f32 can cancel badly if
        # |mean| >> std; acceptable at these scales/tolerances.
        inv_n = 1.0 / float(n_pix)
        mean = ch_sum * inv_n
        var = ch_sq * inv_n - mean * mean               # biased variance
        scale = g_col * jax.lax.rsqrt(var + eps)        # padded rows: scale=0
        shift = be_col - mean * scale

        # ---- Pass 2: streamed scale/shift (+ ReLU), fully pipelined ----
        out2d = pl.pallas_call(
            functools.partial(_scale_shift_relu_kernel, use_relu=relu),
            out_shape=jax.ShapeDtypeStruct((cout_pad, n_pix_pad), out_dtype),
            grid_spec=pltpu.PrefetchScalarGridSpec(
                num_scalar_prefetch=0,
                grid=grid,
                in_specs=[tile_out_spec, col_spec, col_spec],
                out_specs=tile_out_spec),
            compiler_params=pltpu.CompilerParams(
                dimension_semantics=("parallel", "parallel"),
                vmem_limit_bytes=vmem_limit),
        )(conv2d, scale, shift)
    else:
        # ---- Single pass: GEMM + bias (+ ReLU), tiled writeback ----
        out2d = pl.pallas_call(
            functools.partial(_gemm_bias_relu_kernel, use_relu=relu),
            out_shape=jax.ShapeDtypeStruct((cout_pad, n_pix_pad), out_dtype),
            grid_spec=pltpu.PrefetchScalarGridSpec(
                num_scalar_prefetch=0,
                grid=grid,
                in_specs=[patch_spec, w_spec, col_spec],
                out_specs=tile_out_spec),
            compiler_params=pltpu.CompilerParams(
                dimension_semantics=("parallel", "parallel"),
                vmem_limit_bytes=vmem_limit),
        )(patches, w2, b_col)

    # (Cout, Npix) -> NCHW.  TODO(synk): fold N into the grid / pixel ordering
    # so the kernel writes (N, Cout, OH*OW) slabs and this transpose disappears.
    out = out2d[:Cout, :n_pix].reshape(Cout, N, OH, OW)
    return jnp.transpose(out, (1, 0, 2, 3))


def _reference(x, w, b, gamma, beta, *, stride, padding, batchnorm, relu, eps):
    """Pure-JAX f32 reference matching PyTorch ConvBlock training-mode forward."""
    y = jax.lax.conv_general_dilated(
        x, w, window_strides=(stride, stride),
        padding=[(padding, padding), (padding, padding)],
        dimension_numbers=("NCHW", "OIHW", "NCHW"))
    y = y + b.reshape(1, -1, 1, 1)
    if batchnorm:
        mean = jnp.mean(y, axis=(0, 2, 3), keepdims=True)
        var = jnp.mean((y - mean) ** 2, axis=(0, 2, 3), keepdims=True)
        y = ((y - mean) * jax.lax.rsqrt(var + eps)
             * gamma.reshape(1, -1, 1, 1) + beta.reshape(1, -1, 1, 1))
    if relu:
        y = jnp.maximum(y, 0.0)
    return y


if __name__ == "__main__":
    # ConvBlock(in_channels=4, out_channels=8, kernel_size=3, stride=1,
    #           padding=0, batchnorm=True, activation=ReLU, dropout=False)
    N, Cin, H, W = 2, 4, 16, 16
    Cout, K = 8, 3

    key = jax.random.PRNGKey(0)
    kx, kw, kb = jax.random.split(key, 3)

    x = jax.random.normal(kx, (N, Cin, H, W), dtype=jnp.float32)

    fan_in = Cin * K * K
    bound = 1.0 / (fan_in ** 0.5)
    w_oihw = jax.random.uniform(kw, (Cout, Cin, K, K), jnp.float32,
                                minval=-bound, maxval=bound)
    bias = jax.random.uniform(kb, (Cout,), jnp.float32,
                              minval=-bound, maxval=bound)
    gamma = jnp.ones((Cout,), jnp.float32)
    beta = jnp.zeros((Cout,), jnp.float32)

    # Default ConvBlock config: conv -> BN -> ReLU.
    y = conv_block_forward(x, w_oihw, bias, gamma, beta,
                           stride=1, padding=0, batchnorm=True, relu=True)
    y = jax.block_until_ready(y)
    assert y.shape == (N, Cout, H - K + 1, W - K + 1), y.shape
    y_ref = _reference(x, w_oihw, bias, gamma, beta,
                       stride=1, padding=0, batchnorm=True, relu=True, eps=1e-5)
    err = float(jnp.max(jnp.abs(y - y_ref)))
    assert err < 0.1, f"BN path max abs error vs reference: {err}"

    # Non-BN config (conv + bias + ReLU), padding=1: exercises the fused path.
    y2 = conv_block_forward(x, w_oihw, bias, gamma, beta,
                            stride=1, padding=1, batchnorm=False, relu=True)
    y2 = jax.block_until_ready(y2)
    assert y2.shape == (N, Cout, H, W), y2.shape
    y2_ref = _reference(x, w_oihw, bias, gamma, beta,
                        stride=1, padding=1, batchnorm=False, relu=True, eps=1e-5)
    err2 = float(jnp.max(jnp.abs(y2 - y2_ref)))
    assert err2 < 0.1, f"no-BN path max abs error vs reference: {err2}"

    print("KERNEL_OK")
</pallas_src>

<mosaic_0001>
module attributes {stable_mosaic.version = 11 : i64} {
  func.func @_gemm_stats_kernel(%arg0: i32, %arg1: i32, %arg2: memref<48x512xbf16, #tpu.memory_space<vmem>>, %arg3: memref<16x48xbf16, #tpu.memory_space<vmem>>, %arg4: memref<16x512xf32, #tpu.memory_space<vmem>>, %arg5: memref<16x1xf32, #tpu.memory_space<vmem>>, %arg6: memref<16x1xf32, #tpu.memory_space<vmem>>) attributes {dimension_semantics = [#tpu.dimension_semantics<parallel>, #tpu.dimension_semantics<arbitrary>], iteration_bounds = array<i64: 1, 1>, scalar_prefetch = 0 : i64, scratch_operands = 0 : i64, tpu.core_type = #tpu.core_type<tc>, window_params = [{transform_indices = @transform_0, window_bounds = array<i64: 48, 512>}, {transform_indices = @transform_1, window_bounds = array<i64: 16, 48>}, {transform_indices = @transform_2, window_bounds = array<i64: 16, 512>}, {transform_indices = @transform_3, window_bounds = array<i64: 16, 1>}, {transform_indices = @transform_4, window_bounds = array<i64: 16, 1>}]} {
    %c0 = arith.constant 0 : index
    %c0_0 = arith.constant 0 : index
    %0 = vector.load %arg3[%c0, %c0_0] : memref<16x48xbf16, #tpu.memory_space<vmem>>, vector<16x48xbf16>
    %c0_1 = arith.constant 0 : index
    %c0_2 = arith.constant 0 : index
    %1 = vector.load %arg2[%c0_1, %c0_2] : memref<48x512xbf16, #tpu.memory_space<vmem>>, vector<48x512xbf16>
    %cst = arith.constant dense<0.000000e+00> : vector<16x512xf32>
    %2 = tpu.matmul %0, %1, %cst {dimension_numbers = #tpu.dot_dimension_numbers<[1], [0], [0], [1], [0, 0, 1, 1], [], []>} : vector<16x48xbf16>, vector<48x512xbf16>, vector<16x512xf32> -> vector<16x512xf32>
    %c0_i32 = arith.constant 0 : i32
    %3 = arith.cmpi eq, %arg1, %c0_i32 : i32
    %4 = arith.extui %3 : i1 to i32
    %c0_i32_3 = arith.constant 0 : i32
    %5 = arith.cmpi ne, %4, %c0_i32_3 : i32
    scf.if %5 {
      %cst_16 = arith.constant 0.000000e+00 : f32
      %18 = vector.broadcast %cst_16 : f32 to vector<16x1xf32>
      %c0_17 = arith.constant 0 : index
      %c0_18 = arith.constant 0 : index
      %19 = vector.load %arg5[%c0_17, %c0_18] : memref<16x1xf32, #tpu.memory_space<vmem>>, vector<16x1xf32>
      tpu.vector_store %arg5[%c0_17, %c0_18], %18 {strides = array<i32>} : memref<16x1xf32, #tpu.memory_space<vmem>>, vector<16x1xf32>,
      %cst_19 = arith.constant 0.000000e+00 : f32
      %20 = vector.broadcast %cst_19 : f32 to vector<16x1xf32>
      %c0_20 = arith.constant 0 : index
      %c0_21 = arith.constant 0 : index
      %21 = vector.load %arg6[%c0_20, %c0_21] : memref<16x1xf32, #tpu.memory_space<vmem>>, vector<16x1xf32>
      tpu.vector_store %arg6[%c0_20, %c0_21], %20 {strides = array<i32>} : memref<16x1xf32, #tpu.memory_space<vmem>>, vector<16x1xf32>,
    } else {
    }
    %c0_4 = arith.constant 0 : index
    %c0_5 = arith.constant 0 : index
    %6 = vector.load %arg5[%c0_4, %c0_5] : memref<16x1xf32, #tpu.memory_space<vmem>>, vector<16x1xf32>
    %cst_6 = arith.constant dense<0.000000e+00> : vector<16xf32>
    %7 = vector.multi_reduction <add>, %2, %cst_6 [1] : vector<16x512xf32> to vector<16xf32>
    %8 = vector.shape_cast %7 : vector<16xf32> to vector<16x1xf32>
    %9 = arith.addf %6, %8 : vector<16x1xf32>
    %c0_7 = arith.constant 0 : index
    %c0_8 = arith.constant 0 : index
    %10 = vector.load %arg5[%c0_7, %c0_8] : memref<16x1xf32, #tpu.memory_space<vmem>>, vector<16x1xf32>
    tpu.vector_store %arg5[%c0_7, %c0_8], %9 {strides = array<i32>} : memref<16x1xf32, #tpu.memory_space<vmem>>, vector<16x1xf32>,
    %c0_9 = arith.constant 0 : index
    %c0_10 = arith.constant 0 : index
    %11 = vector.load %arg6[%c0_9, %c0_10] : memref<16x1xf32, #tpu.memory_space<vmem>>, vector<16x1xf32>
    %12 = arith.mulf %2, %2 : vector<16x512xf32>
    %cst_11 = arith.constant dense<0.000000e+00> : vector<16xf32>
    %13 = vector.multi_reduction <add>, %12, %cst_11 [1] : vector<16x512xf32> to vector<16xf32>
    %14 = vector.shape_cast %13 : vector<16xf32> to vector<16x1xf32>
    %15 = arith.addf %11, %14 : vector<16x1xf32>
    %c0_12 = arith.constant 0 : index
    %c0_13 = arith.constant 0 : index
    %16 = vector.load %arg6[%c0_12, %c0_13] : memref<16x1xf32, #tpu.memory_space<vmem>>, vector<16x1xf32>
    tpu.vector_store %arg6[%c0_12, %c0_13], %15 {strides = array<i32>} : memref<16x1xf32, #tpu.memory_space<vmem>>, vector<16x1xf32>,
    %c0_14 = arith.constant 0 : index
    %c0_15 = arith.constant 0 : index
    %17 = vector.load %arg4[%c0_14, %c0_15] : memref<16x512xf32, #tpu.memory_space<vmem>>, vector<16x512xf32>
    tpu.vector_store %arg4[%c0_14, %c0_15], %2 {strides = array<i32>} : memref<16x512xf32, #tpu.memory_space<vmem>>, vector<16x512xf32>,
    return
  }
  func.func @transform_0(%arg0: i32, %arg1: i32) -> (i32, i32) {
    %c0_i32 = arith.constant 0 : i32
    %c0_i32_0 = arith.constant 0 : i32
    return %c0_i32, %arg1 : i32, i32
  }
  func.func @transform_1(%arg0: i32, %arg1: i32) -> (i32, i32) {
    %c0_i32 = arith.constant 0 : i32
    %c0_i32_0 = arith.constant 0 : i32
    return %arg0, %c0_i32 : i32, i32
  }
  func.func @transform_2(%arg0: i32, %arg1: i32) -> (i32, i32) {
    %c0_i32 = arith.constant 0 : i32
    return %arg0, %arg1 : i32, i32
  }
  func.func @transform_3(%arg0: i32, %arg1: i32) -> (i32, i32) {
    %c0_i32 = arith.constant 0 : i32
    %c0_i32_0 = arith.constant 0 : i32
    return %arg0, %c0_i32 : i32, i32
  }
  func.func @transform_4(%arg0: i32, %arg1: i32) -> (i32, i32) {
    %c0_i32 = arith.constant 0 : i32
    %c0_i32_0 = arith.constant 0 : i32
    return %arg0, %c0_i32 : i32, i32
  }
}

</mosaic_0001>

<llo_original>
// kernel: tpu_custom_call.1
$region0: #{tpu_custom_call.1}
  #allocation0 [shape = 'u32[]', space=smem, size = 0x4, offset = 0x4, fixed_abs, tag = 'smem constant byte address 0x4 - core index']
  #allocation1 [shape = 'u32[144,128]{1,0:T(1,128)}', space=vmem, size = 0x12000, scoped, tag = 'internal scratch']
  %s0 = inlined_call_operand.hbm [shape: bf16[48,512], index: 0, kind: input, shape index: {}]
  %s1 = inlined_call_operand.hbm [shape: bf16[16,48], index: 1, kind: input, shape index: {}]
  %s2 = inlined_call_operand.hbm [shape: f32[16,512], index: 2, kind: output, shape index: {0}]
  %s3 = inlined_call_operand.vmem [shape: f32[16,1], index: 3, kind: output, shape index: {1}]
  %s4 = inlined_call_operand.vmem [shape: f32[16,1], index: 4, kind: output, shape index: {2}]
  %5 = xla_tuple %s2, %s3, %s4
  %s6 = sld [smem:[#allocation0]]
  $region46: #{tpu_custom_call.1} parent=0
    _
  %s8 = ssub.s32 1, %s6
  %s9 = scalar_select 0, %s8, %s6
  $region1: #{tpu_custom_call.1} parent=0
    #allocation2 [shape = 'u8[49152]{0}', space=vmem, size = 0xc000, scoped, tag = 'input window, operand 0, single buffered']
    #allocation3 [shape = 's32[1]{0}', space=sflag, size = 0x4, scoped, tag = 'scoped memory for tpu_custom_call.1']
    #allocation4 [shape = 's32[1]{0}', space=sflag, size = 0x4, scoped, tag = 'scoped memory for tpu_custom_call.1']
    #allocation5 [shape = 'u8[4096]{0}', space=vmem, size = 0x1000, scoped, tag = 'input window, operand 1, single buffered']
    #allocation6 [shape = 's32[1]{0}', space=sflag, size = 0x4, scoped, tag = 'scoped memory for tpu_custom_call.1']
    #allocation7 [shape = 'u8[32768]{0}', space=vmem, size = 0x8000, scoped, tag = 'output window, operand 0, single buffered']
    %10 = vsyncpa [#allocation3], 0
    %11 = vsyncpa [#allocation6], 0
    %12 = vsyncpa [#allocation4], 0
    // Predicated region
    $region2: #{tpu_custom_call.1} parent=1 // pred_check
      _
    $region3: #{tpu_custom_call.1} parent=1 // pred_check_branch
      %14 = sbr.rel (0) target = $region5
    $region4: #{tpu_custom_call.1} parent=1 // pred_region
      %s16 = ssub.s32 1536, 1536
      %17 = vsyncadd [#allocation3], %s16
      %s18 = sshll.u32 [#allocation2], 4
      %s19 = int_to_ptr.vmem [resolvable:$true] %s18
      %24 = dma.hbm_to_vmem [thread:$0]  %s0, 1536, %s19, [#allocation3], 256, 256, 16
    $region5: #{tpu_custom_call.1} parent=1 // pred_fallthru
      _
    // Predicated region
    $region6: #{tpu_custom_call.1} parent=1 // pred_check
      _
    $region7: #{tpu_custom_call.1} parent=1 // pred_check_branch
      %26 = sbr.rel (0) target = $region9
    $region8: #{tpu_custom_call.1} parent=1 // pred_region
      %s28 = ssub.s32 128, 128
      %29 = vsyncadd [#allocation6], %s28
      %s30 = sshll.u32 [#allocation5], 4
      %s31 = int_to_ptr.vmem [resolvable:$true] %s30
      %36 = dma.hbm_to_vmem [thread:$0]  %s1, 128, %s31, [#allocation6], 64, 64, 4
    $region9: #{tpu_custom_call.1} parent=1 // pred_fallthru
      _
    // Predicated region
    $region10: #{tpu_custom_call.1} parent=1 // pred_check
      _
    $region11: #{tpu_custom_call.1} parent=1 // pred_check_branch
      %38 = sbr.rel (0) target = $region13
    $region12: #{tpu_custom_call.1} parent=1 // pred_region
      %39 = dma.done [#allocation3], 1536
    $region13: #{tpu_custom_call.1} parent=1 // pred_fallthru
      _
    // Predicated region
    $region14: #{tpu_custom_call.1} parent=1 // pred_check
      _
    $region15: #{tpu_custom_call.1} parent=1 // pred_check_branch
      %41 = sbr.rel (0) target = $region17
    $region16: #{tpu_custom_call.1} parent=1 // pred_region
      %42 = dma.done [#allocation6], 128
    $region17: #{tpu_custom_call.1} parent=1 // pred_fallthru
      _
    %v44 = vld [vmem:[#allocation5] sm:$0xf]
    %v45 = vld [vmem:[#allocation5 + $0x4] sm:$0xf]
    %v46 = vld [vmem:[#allocation2] sm:$0xff]
    %v47 = vld [vmem:[#allocation2 + $0x8] sm:$0xff]
    %v48 = vld [vmem:[#allocation2 + $0x10] sm:$0xff]
    %v49 = vld [vmem:[#allocation2 + $0x18] sm:$0xff]
    %v50 = vld [vmem:[#allocation2 + $0x20] sm:$0xff]
    %v51 = vld [vmem:[#allocation2 + $0x28] sm:$0xff]
    %v52 = vld [vmem:[#allocation2 + $0x30] sm:$0xff]
    %v53 = vld [vmem:[#allocation2 + $0x38] sm:$0xff]
    %v54 = vld [vmem:[#allocation2 + $0x40] sm:$0xff]
    %v55 = vld [vmem:[#allocation2 + $0x48] sm:$0xff]
    %v56 = vld [vmem:[#allocation2 + $0x50] sm:$0xff]
    %v57 = vld [vmem:[#allocation2 + $0x58] sm:$0xff]
    %v60 = vunpack.c.l.b16 %v44
    %v61 = vunpack.c.l.b16 %v45
    %v62 = vpack.c.b16 %v61, %v60
    %v75 = vunpack.c.l.b16 %v46
    %v76 = vunpack.c.h.b16 %v46
    %v77 = vunpack.c.l.b16 %v47
    %v78 = vunpack.c.h.b16 %v47
    %v79 = vunpack.c.l.b16 %v48
    %v80 = vunpack.c.h.b16 %v48
    %v81 = vunpack.c.l.b16 %v49
    %v82 = vunpack.c.h.b16 %v49
    %v83 = vunpack.c.l.b16 %v50
    %v84 = vunpack.c.h.b16 %v50
    %v85 = vunpack.c.l.b16 %v51
    %v86 = vunpack.c.h.b16 %v51
    %v87 = vunpack.c.l.b16 %v52
    %v88 = vunpack.c.h.b16 %v52
    %v89 = vunpack.c.l.b16 %v53
    %v90 = vunpack.c.h.b16 %v53
    %v91 = vunpack.c.l.b16 %v54
    %v92 = vunpack.c.h.b16 %v54
    %v93 = vunpack.c.l.b16 %v55
    %v94 = vunpack.c.h.b16 %v55
    %v95 = vunpack.c.l.b16 %v56
    %v96 = vunpack.c.h.b16 %v56
    %v97 = vunpack.c.l.b16 %v57
    %v98 = vunpack.c.h.b16 %v57
    %v99 = vpack.c.b16 %v79, %v75
    %v100 = vpack.c.b16 %v80, %v76
    %v101 = vpack.c.b16 %v81, %v77
    %v102 = vpack.c.b16 %v82, %v78
    %v103 = vpack.c.b16 %v87, %v83
    %v104 = vpack.c.b16 %v88, %v84
    %v105 = vpack.c.b16 %v89, %v85
    %v106 = vpack.c.b16 %v90, %v86
    %v107 = vpack.c.b16 %v95, %v91
    %v108 = vpack.c.b16 %v96, %v92
    %v109 = vpack.c.b16 %v97, %v93
    %v110 = vpack.c.b16 %v98, %v94
    %vm123 = vcmask 392192
    %v125 = vsel %vm123, %v62, 0
    %127 = vmatprep.subr.bf16.mxu0 0
    %128 = vmatpush1.bf16.msra.mxu0 0
    %129 = vmatprep.subr.bf16.mxu0 0
    %130 = vmatpush1.bf16.msra.mxu0 0
    %131 = vmatprep.subr.bf16.mxu0 0
    %132 = vmatpush1.bf16.msra.mxu0 0
    %133 = vmatprep.subr.bf16.mxu0 0
    %134 = vmatpush1.bf16.msra.mxu0 0
    %135 = vmatprep.subr.bf16.mxu0 0
    %136 = vmatpush1.bf16.msra.mxu0 0
    %137 = vmatprep.subr.bf16.mxu0 %v108
    %138 = vmatpush1.bf16.msra.mxu0 %v107
    %139 = vmatprep.subr.bf16.mxu0 %v104
    %140 = vmatpush1.bf16.msra.mxu0 %v103
    %141 = vmatprep.subr.bf16.mxu0 %v100
    %142 = vmatpush1.bf16.msra.mxu0 %v99
    %143 = vmatprep.subr.bf16.mxu0 0
    %144 = vmatpush2.bf16.msra.mxu0 0
    %145 = vmatprep.subr.bf16.mxu0 0
    %146 = vmatpush2.bf16.msra.mxu0 0
    %147 = vmatprep.subr.bf16.mxu0 0
    %148 = vmatpush2.bf16.msra.mxu0 0
    %149 = vmatprep.subr.bf16.mxu0 0
    %150 = vmatpush2.bf16.msra.mxu0 0
    %151 = vmatprep.subr.bf16.mxu0 0
    %152 = vmatpush2.bf16.msra.mxu0 0
    %153 = vmatprep.subr.bf16.mxu0 0
    %154 = vmatpush2.bf16.msra.mxu0 0
    %155 = vmatprep.subr.bf16.mxu0 0
    %156 = vmatpush2.bf16.msra.mxu0 0
    %157 = vmatprep.subr.bf16.mxu0 0
    %158 = vmatpush2.bf16.msra.mxu0 0
    %159 = vmatprep.mubr.bf16.mxu0 0
    %160 = vmatmul.mubr.bf16.gmra.mxu0 %v125
    %v161 = vpop.f32.mrf.mxu0
    %v162 = vadd.f32 0.0, %v161
    %v163 = vpop.f32.mrf.mxu0
    %v164 = vadd.f32 0.0, %v163
    %v165 = vpop.f32.mrf.mxu0
    %v166 = vadd.f32 0.0, %v165
    %v167 = vpop.f32.mrf.mxu0
    %v168 = vadd.f32 0.0, %v167
    %169 = vdwg.mxu0
    %170 = vmatprep.subr.bf16.mxu0 0
    %171 = vmatpush1.bf16.msra.mxu0 0
    %172 = vmatprep.subr.bf16.mxu0 0
    %173 = vmatpush1.bf16.msra.mxu0 0
    %174 = vmatprep.subr.bf16.mxu0 0
    %175 = vmatpush1.bf16.msra.mxu0 0
    %176 = vmatprep.subr.bf16.mxu0 0
    %177 = vmatpush1.bf16.msra.mxu0 0
    %178 = vmatprep.subr.bf16.mxu0 0
    %179 = vmatpush1.bf16.msra.mxu0 0
    %180 = vmatprep.subr.bf16.mxu0 %v110
    %181 = vmatpush1.bf16.msra.mxu0 %v109
    %182 = vmatprep.subr.bf16.mxu0 %v106
    %183 = vmatpush1.bf16.msra.mxu0 %v105
    %184 = vmatprep.subr.bf16.mxu0 %v102
    %185 = vmatpush1.bf16.msra.mxu0 %v101
    %186 = vmatprep.subr.bf16.mxu0 0
    %187 = vmatpush2.bf16.msra.mxu0 0
    %188 = vmatprep.subr.bf16.mxu0 0
    %189 = vmatpush2.bf16.msra.mxu0 0
    %190 = vmatprep.subr.bf16.mxu0 0
    %191 = vmatpush2.bf16.msra.mxu0 0
    %192 = vmatprep.subr.bf16.mxu0 0
    %193 = vmatpush2.bf16.msra.mxu0 0
    %194 = vmatprep.subr.bf16.mxu0 0
    %195 = vmatpush2.bf16.msra.mxu0 0
    %196 = vmatprep.subr.bf16.mxu0 0
    %197 = vmatpush2.bf16.msra.mxu0 0
    %198 = vmatprep.subr.bf16.mxu0 0
    %199 = vmatpush2.bf16.msra.mxu0 0
    %200 = vmatprep.subr.bf16.mxu0 0
    %201 = vmatpush2.bf16.msra.mxu0 0
    %202 = vmatprep.mubr.bf16.mxu0 0
    %203 = vmatmul.mubr.bf16.gmra.mxu0 %v125
    %v204 = vpop.f32.mrf.mxu0
    %v205 = vadd.f32 0.0, %v204
    %v206 = vpop.f32.mrf.mxu0
    %v207 = vadd.f32 0.0, %v206
    %v208 = vpop.f32.mrf.mxu0
    %v209 = vadd.f32 0.0, %v208
    %v210 = vpop.f32.mrf.mxu0
    %v211 = vadd.f32 0.0, %v210
    %212 = vdwg.mxu0
    %p213 = scmp.eq.s32.totalorder 0, 0
    // Predicated region
    $region18: #{tpu_custom_call.1} parent=1 // pred_check
      %p214 = pneg %p213
    $region19: #{tpu_custom_call.1} parent=1 // pred_check_branch
      %216 = sbr.rel (%p214) target = $region21
    $region20: #{tpu_custom_call.1} parent=1 // pred_region
      %vm217 = vcmask 7168
      %218 = vst.msk [vmem:[%s3] sm:$0xff] %vm217, 0.0
      %219 = vst.msk [vmem:[%s3 + $0x8] sm:$0xff] %vm217, 0.0
      %220 = vst.msk [vmem:[%s4] sm:$0xff] %vm217, 0.0
      %221 = vst.msk [vmem:[%s4 + $0x8] sm:$0xff] %vm217, 0.0
    $region21: #{tpu_custom_call.1} parent=1 // pred_fallthru
      _
    %v222 = vld [vmem:[%s3] sm:$0xff]
    %v223 = vld [vmem:[%s3 + $0x8] sm:$0xff]
    %v224 = vadd.f32 %v162, %v164
    %v225 = vadd.f32 %v224, %v205
    %v226 = vadd.f32 %v225, %v207
    %227 = vadd.xlane.f32.xlu0 %v226
    %v228 = vpop.xlane.xlu0 %227
    %v229 = vadd.f32 %v166, %v168
    %v230 = vadd.f32 %v229, %v209
    %v231 = vadd.f32 %v230, %v211
    %232 = vadd.xlane.f32.xlu0 %v231
    %v233 = vpop.xlane.xlu0 %232
    %v234 = vadd.f32 %v222, %v228
    %v235 = vadd.f32 %v223, %v233
    %vm236 = vcmask 7168
    %237 = vst.msk [vmem:[%s3] sm:$0xff] %vm236, %v234
    %238 = vst.msk [vmem:[%s3 + $0x8] sm:$0xff] %vm236, %v235
    %v239 = vld [vmem:[%s4] sm:$0xff]
    %v240 = vld [vmem:[%s4 + $0x8] sm:$0xff]
    %v241 = vmul.f32 %v162, %v162
    %v242 = vmul.f32 %v164, %v164
    %v243 = vmul.f32 %v205, %v205
    %v244 = vmul.f32 %v207, %v207
    %v245 = vmul.f32 %v166, %v166
    %v246 = vmul.f32 %v168, %v168
    %v247 = vmul.f32 %v209, %v209
    %v248 = vmul.f32 %v211, %v211
    %v249 = vadd.f32 %v241, %v242
    %v250 = vadd.f32 %v249, %v243
    %v251 = vadd.f32 %v250, %v244
    %252 = vadd.xlane.f32.xlu0 %v251
    %v253 = vpop.xlane.xlu0 %252
    %v254 = vadd.f32 %v245, %v246
    %v255 = vadd.f32 %v254, %v247
    %v256 = vadd.f32 %v255, %v248
    %257 = vadd.xlane.f32.xlu0 %v256
    %v258 = vpop.xlane.xlu0 %257
    %v259 = vadd.f32 %v239, %v253
    %v260 = vadd.f32 %v240, %v258
    %261 = vst.msk [vmem:[%s4] sm:$0xff] %vm236, %v259
    %262 = vst.msk [vmem:[%s4 + $0x8] sm:$0xff] %vm236, %v260
    %263 = vst [vmem:[#allocation7] sm:$0xff] %v162
    %264 = vst [vmem:[#allocation7 + $0x8] sm:$0xff] %v164
    %265 = vst [vmem:[#allocation7 + $0x10] sm:$0xff] %v205
    %266 = vst [vmem:[#allocation7 + $0x18] sm:$0xff] %v207
    %267 = vst [vmem:[#allocation7 + $0x20] sm:$0xff] %v166
    %268 = vst [vmem:[#allocation7 + $0x28] sm:$0xff] %v168
    %269 = vst [vmem:[#allocation7 + $0x30] sm:$0xff] %v209
    %270 = vst [vmem:[#allocation7 + $0x38] sm:$0xff] %v211
    // Predicated region
    $region22: #{tpu_custom_call.1} parent=1 // pred_check
      _
    $region23: #{tpu_custom_call.1} parent=1 // pred_check_branch
      %272 = sbr.rel (0) target = $region25
    $region24: #{tpu_custom_call.1} parent=1 // pred_region
      %s274 = ssub.s32 1024, 1024
      %275 = vsyncadd [#allocation4], %s274
      %s276 = sshll.u32 [#allocation7], 4
      %s277 = int_to_ptr.vmem [resolvable:$true] %s276
      %282 = dma.vmem_to_hbm [thread:$0]  %s277, 1024, %s2, [#allocation4], 512, 512, 32
    $region25: #{tpu_custom_call.1} parent=1 // pred_fallthru
      _
    // Predicated region
    $region26: #{tpu_custom_call.1} parent=1 // pred_check
      _
    $region27: #{tpu_custom_call.1} parent=1 // pred_check_branch
      %284 = sbr.rel (0) target = $region29
    $region28: #{tpu_custom_call.1} parent=1 // pred_region
      _
    $region29: #{tpu_custom_call.1} parent=1 // pred_fallthru
      _
    // Predicated region
    $region30: #{tpu_custom_call.1} parent=1 // pred_check
      _
    $region31: #{tpu_custom_call.1} parent=1 // pred_check_branch
      %286 = sbr.rel (0) target = $region33
    $region32: #{tpu_custom_call.1} parent=1 // pred_region
      _
    $region33: #{tpu_custom_call.1} parent=1 // pred_fallthru
      _
    // Predicated region
    $region34: #{tpu_custom_call.1} parent=1 // pred_check
      _
    $region35: #{tpu_custom_call.1} parent=1 // pred_check_branch
      %288 = sbr.rel (0) target = $region37
    $region36: #{tpu_custom_call.1} parent=1 // pred_region
      %289 = dma.done [#allocation4], 1024
    $region37: #{tpu_custom_call.1} parent=1 // pred_fallthru
      _
    // Predicated region
    $region38: #{tpu_custom_call.1} parent=1 // pred_check
      _
    $region39: #{tpu_custom_call.1} parent=1 // pred_check_branch
      %291 = sbr.rel (0) target = $region41
    $region40: #{tpu_custom_call.1} parent=1 // pred_region
      _
    $region41: #{tpu_custom_call.1} parent=1 // pred_fallthru
      _
    // Predicated region
    $region42: #{tpu_custom_call.1} parent=1 // pred_check
      _
    $region43: #{tpu_custom_call.1} parent=1 // pred_check_branch
      %293 = sbr.rel (0) target = $region45
    $region44: #{tpu_custom_call.1} parent=1 // pred_region
      _
    $region45: #{tpu_custom_call.1} parent=1 // pred_fallthru
      _
    %294 = vsyncpa [#allocation3], 1
    %295 = vsyncpa [#allocation6], 1
    %296 = vsyncpa [#allocation4], 1

</llo_original>
